<compile_context>
chip_gen: v5e
topology: v5e:2x2
jax: 0.10.0
libtpu: 0.0.40
codegen_flags: <defaults>
</compile_context>

<pallas_src>
import itertools
import numpy as np
import jax
import jax.numpy as jnp
from jax.experimental import pallas as pl
from jax.experimental.pallas import tpu as pltpu


# ----------------------------- config (replaces YAML) -----------------------------
AMM_HEADER = {"num_tables": 2}
AMM_TABLE_PROPS = [0.6, 0.4]          # 'prop' per table
AMM_TABLE_KNN = [False, False]        # knn=False -> low-rank path (the implementable one)


def get_set_sizes(N, p):
    p = np.array(p, dtype=np.float64)
    p = p / p.sum()
    sizes = np.floor(N * p).astype(int).tolist()
    difference = N - sum(sizes)
    for i in range(difference):
        sizes[i % len(sizes)] += 1
    return sizes


def _round_up(x, mult):
    return ((x + mult - 1) // mult) * mult


def _is_bf16(dt):
    return np.dtype(dt) == np.dtype(jnp.bfloat16)


def _pad2d(a, rows, cols, dtype):
    a = a.astype(dtype)
    r, c = a.shape
    if r == rows and c == cols:
        return a
    return jnp.pad(a, ((0, rows - r), (0, cols - c)))


# ----------------------------- hardware-aware budgeting -----------------------------
def _tpu_vmem_budget():
    """(vmem_limit_bytes, prefer_split_output_tiles) derived from the local TPU."""
    phys = 128 << 20
    try:
        phys = int(pltpu.get_tpu_info().vmem_capacity_bytes)
    except Exception:
        pass
    # Leave headroom under physical VMEM; 96-100 MiB on 128 MiB parts, ~48 MiB on v7x.
    budget = max(32 << 20, min((phys * 3) // 4, 100 << 20))
    # Small-VMEM parts (v7x: 64 MiB, 2 TCs) want >=2 output tiles so the "parallel"
    # grid axis can span both TensorCores; 1-TC parts prefer fewer, larger tiles.
    prefer_split = phys <= (64 << 20)
    try:
        prefer_split = prefer_split or int(getattr(jax.devices()[0], "num_cores", 1)) > 1
    except Exception:
        pass
    return budget, prefer_split


def _select_tiles(Bp, npad, kpad, mpad, in_itemsize, vmem_budget, prefer_split):
    # Component (contraction) tile: 256-512 preferred.
    tile_k = 128
    for cand in (512, 256, 128):
        if kpad % cand == 0:
            tile_k = cand
            break
    # Output tile: largest lane-dense divisor of mpad within the VMEM-derived cap.
    m_cap = 2048 if vmem_budget >= (80 << 20) else (1024 if vmem_budget >= (48 << 20) else 512)
    tile_m = 128
    for cand in (2048, 1024, 512, 256, 128):
        if cand <= m_cap and mpad % cand == 0:
            tile_m = cand
            break
    if prefer_split and mpad >= 256:
        while tile_m > 128 and (mpad // tile_m) < 2:
            tile_m //= 2

    def vmem_est(tm, tk):
        # Conservative: default double-buffering + room for a deeper Vt buffer + f32 acc.
        return (2 * Bp * npad * in_itemsize      # x (may collapse to 1 buffer)
                + 2 * npad * tk * in_itemsize    # keys tile
                + 3 * tk * tm * in_itemsize      # values_t tile
                + 2 * Bp * tm * 4                # output tile (f32)
                + Bp * tm * 4)                   # accumulator

    while vmem_est(tile_m, tile_k) > vmem_budget and tile_m > 128:
        tile_m //= 2
    while vmem_est(tile_m, tile_k) > vmem_budget and tile_k > 128:
        tile_k //= 2
    return tile_m, tile_k


# ----------------------------- Pallas kernel -----------------------------
def amm_kernel(x_ref, k_ref, v_ref, y_ref, acc_ref):
    """One (output-tile j, component-tile k) step of y = (x @ K) @ Vt.

    x_ref   : (Bp, Np)       padded queries (grid-invariant)
    k_ref   : (Np, tile_k)   scale-folded keys slice (V * S, zero-padded)
    v_ref   : (tile_k, tile_m) pre-transposed values slice (U.T rows)
    y_ref   : (Bp, tile_m)   lane-dense output tile (written at last k)
    acc_ref : (Bp, tile_m)   f32 accumulator scratch
    """
    kk = pl.program_id(1)

    @pl.when(kk == 0)
    def _():
        acc_ref[...] = jnp.zeros_like(acc_ref)

    alphas = jnp.dot(x_ref[...], k_ref[...], preferred_element_type=jnp.float32)
    acc_ref[...] += jnp.dot(alphas.astype(v_ref.dtype), v_ref[...],
                            preferred_element_type=jnp.float32)

    @pl.when(kk == pl.num_programs(1) - 1)
    def _():
        y_ref[...] = acc_ref[...].astype(y_ref.dtype)


def _build_amm_call(Bp, npad, kpad, mpad, tile_m, tile_k, in_dtype,
                    vmem_budget, use_buffered):
    grid = (mpad // tile_m, kpad // tile_k)

    x_kwargs = {}
    if use_buffered:
        # x's index_map is constant across the grid: one VMEM copy is enough.
        x_kwargs["pipeline_mode"] = pl.Buffered(1)

    in_specs = [
        pl.BlockSpec((Bp, npad), lambda j, k: (0, 0), **x_kwargs),
        pl.BlockSpec((npad, tile_k), lambda j, k: (0, k)),
        pl.BlockSpec((tile_k, tile_m), lambda j, k: (k, j)),
    ]

    isz = np.dtype(in_dtype).itemsize
    flops = 2 * Bp * npad * kpad + 2 * Bp * kpad * mpad
    bytes_accessed = (Bp * npad + npad * kpad + kpad * mpad) * isz + Bp * mpad * 4

    return pl.pallas_call(
        amm_kernel,
        out_shape=jax.ShapeDtypeStruct((Bp, mpad), jnp.float32),
        grid_spec=pltpu.PrefetchScalarGridSpec(
            num_scalar_prefetch=0,
            grid=grid,
            in_specs=in_specs,
            out_specs=pl.BlockSpec((Bp, tile_m), lambda j, k: (0, j)),
            scratch_shapes=[pltpu.VMEM((Bp, tile_m), jnp.float32)],
        ),
        compiler_params=pltpu.CompilerParams(
            dimension_semantics=("parallel", "arbitrary"),
            vmem_limit_bytes=vmem_budget,
        ),
        cost_estimate=pl.CostEstimate(flops=flops, transcendentals=0,
                                      bytes_accessed=bytes_accessed),
    )


def amm_forward_pallas(x, keys_scaled_pad, values_t_pad, y_dim):
    """x: (B, n) unpadded; keys: (Np, Kp) padded; values_t: (Kp, Mp) padded."""
    B, n = x.shape
    npad, kpad = keys_scaled_pad.shape
    kpad2, mpad = values_t_pad.shape
    assert kpad == kpad2 and n <= npad and y_dim <= mpad
    in_dtype = keys_scaled_pad.dtype

    sub = 16 if _is_bf16(in_dtype) else 8
    Bp = _round_up(max(B, 1), sub)
    if (B, n) == (Bp, npad) and x.dtype == in_dtype:
        x_p = x                      # already aligned: no wrapper-side re-materialization
    else:
        x_p = _pad2d(x, Bp, npad, in_dtype)

    vmem_budget, prefer_split = _tpu_vmem_budget()
    tile_m, tile_k = _select_tiles(Bp, npad, kpad, mpad,
                                   np.dtype(in_dtype).itemsize,
                                   vmem_budget, prefer_split)

    try:
        call = _build_amm_call(Bp, npad, kpad, mpad, tile_m, tile_k, in_dtype,
                               vmem_budget, use_buffered=True)
        y_pad = call(x_p, keys_scaled_pad, values_t_pad)
    except Exception:
        # Fallback if this JAX build rejects pipeline_mode=pl.Buffered(1).
        call = _build_amm_call(Bp, npad, kpad, mpad, tile_m, tile_k, in_dtype,
                               vmem_budget, use_buffered=False)
        y_pad = call(x_p, keys_scaled_pad, values_t_pad)

    return y_pad[:B, :y_dim]


# ----------------------------- AMM parameter construction -----------------------------
def build_amm(weight, compute_dtype=jnp.bfloat16):
    """Mirrors AMM.__init__ for the low-rank (knn=False) configuration.

    weight: (n, m). Returns (keys_scaled_padded (Np,Kp), values_t_padded (Kp,Mp), m).
    Scales folded into keys, values pre-transposed, tables concatenated along the
    component axis, stored in `compute_dtype`, zero-padded to TPU-friendly shapes
    (n -> multiple of 8/16, component & output dims -> multiples of 128).
    """
    n, m = weight.shape
    num_tables = AMM_HEADER["num_tables"]
    num_components = min(n, m)
    sizes = get_set_sizes(num_components, AMM_TABLE_PROPS)
    start_indexes = [0]
    start_indexes.extend(list(itertools.accumulate(sizes))[:-1])
    end_indexes = list(itertools.accumulate(sizes))

    # torch: V, S, U = svd(W); U = U.T  (the module's 'V' is the LEFT factor,
    # its 'U' is the transposed RIGHT factor — named left/right here to avoid confusion).
    left, S, right_h = jnp.linalg.svd(weight.astype(jnp.float32), full_matrices=False)
    right = right_h.T  # (m, r)

    key_cols, val_rows = [], []
    for i in range(num_tables):
        s_ind, e_ind = start_indexes[i], end_indexes[i]
        if sizes[i] == 0:
            # 'drop' table: contributes exactly 0 -> skip (no wasted zero matmuls).
            continue
        if AMM_TABLE_KNN[i]:
            # TODO(synk): knn=True path requires `ista` (undefined in source); unsupported.
            raise NotImplementedError("knn=True tables are not supported")
        key_cols.append(left[:, s_ind:e_ind] * S[s_ind:e_ind][None, :])  # (n, k_i)
        val_rows.append(right[:, s_ind:e_ind].T)                          # (k_i, m)

    if key_cols:
        keys_scaled = jnp.concatenate(key_cols, axis=1)   # (n, Ktot)
        values_t = jnp.concatenate(val_rows, axis=0)      # (Ktot, m)
    else:
        keys_scaled = jnp.zeros((n, 1), jnp.float32)
        values_t = jnp.zeros((1, m), jnp.float32)

    ktot = keys_scaled.shape[1]
    sub = 16 if _is_bf16(compute_dtype) else 8
    npad = _round_up(max(n, 1), sub)      # contraction/sublane axis: 8/16-align only
    kpad = _round_up(max(ktot, 1), 128)   # lane axes: 128-align
    mpad = _round_up(max(m, 1), 128)

    keys_scaled_pad = _pad2d(keys_scaled, npad, kpad, compute_dtype)  # (Np, Kp)
    values_t_pad = _pad2d(values_t, kpad, mpad, compute_dtype)        # (Kp, Mp)
    return keys_scaled_pad, values_t_pad, m


# ----------------------------- main -----------------------------
if __name__ == "__main__":
    key = jax.random.PRNGKey(0)
    kq, kw = jax.random.split(key)

    # Same shapes as the reference notebook: q = rand(5, 30), W = rand(30, 20)
    q = jax.random.uniform(kq, (5, 30), dtype=jnp.float32)
    W = jax.random.uniform(kw, (30, 20), dtype=jnp.float32)

    # Reference: exact matmul (AMM low-rank split over all singular components
    # reconstructs q @ W up to SVD / float precision).
    y_ref = np.asarray(q @ W)

    # f32 path: exact-reconstruction check.
    K32, V32, y_dim = build_amm(W, compute_dtype=jnp.float32)
    y_f32 = jax.block_until_ready(amm_forward_pallas(q, K32, V32, y_dim))
    assert y_f32.shape == y_ref.shape == (5, 20)
    np.testing.assert_allclose(np.asarray(y_f32), y_ref, rtol=1e-3, atol=1e-3)

    # bf16 operands / f32 accumulation: production configuration (loosened tolerance).
    K16, V16, y_dim = build_amm(W, compute_dtype=jnp.bfloat16)
    y_b16 = jax.block_until_ready(amm_forward_pallas(q, K16, V16, y_dim))
    assert y_b16.shape == y_ref.shape
    np.testing.assert_allclose(np.asarray(y_b16), y_ref, rtol=5e-2, atol=5e-2)

    print("KERNEL_OK")
</pallas_src>

<mosaic_0001>
module attributes {stable_mosaic.version = 11 : i64} {
  func.func @amm_kernel(%arg0: i32, %arg1: i32, %arg2: memref<8x32xf32, #tpu.memory_space<vmem>>, %arg3: memref<32x128xf32, #tpu.memory_space<vmem>>, %arg4: memref<128x128xf32, #tpu.memory_space<vmem>>, %arg5: memref<8x128xf32, #tpu.memory_space<vmem>>, %arg6: memref<8x128xf32, #tpu.memory_space<vmem>>) attributes {dimension_semantics = [#tpu.dimension_semantics<parallel>, #tpu.dimension_semantics<arbitrary>], iteration_bounds = array<i64: 1, 1>, scalar_prefetch = 0 : i64, scratch_operands = 1 : i64, tpu.core_type = #tpu.core_type<tc>, window_params = [{pipeline_mode = #tpu.pipeline_mode<synchronous>, transform_indices = @transform_0, window_bounds = array<i64: 8, 32>}, {transform_indices = @transform_1, window_bounds = array<i64: 32, 128>}, {transform_indices = @transform_2, window_bounds = array<i64: 128, 128>}, {transform_indices = @transform_3, window_bounds = array<i64: 8, 128>}]} {
    %c0_i32 = arith.constant 0 : i32
    %0 = arith.cmpi eq, %arg1, %c0_i32 : i32
    %1 = arith.extui %0 : i1 to i32
    %c0_i32_0 = arith.constant 0 : i32
    %2 = arith.cmpi ne, %1, %c0_i32_0 : i32
    scf.if %2 {
      %cst_13 = arith.constant 0.000000e+00 : f32
      %14 = vector.broadcast %cst_13 : f32 to vector<8x128xf32>
      %c0_14 = arith.constant 0 : index
      %c0_15 = arith.constant 0 : index
      %15 = vector.load %arg6[%c0_14, %c0_15] : memref<8x128xf32, #tpu.memory_space<vmem>>, vector<8x128xf32>
      tpu.vector_store %arg6[%c0_14, %c0_15], %14 {strides = array<i32>} : memref<8x128xf32, #tpu.memory_space<vmem>>, vector<8x128xf32>,
    } else {
    }
    %c0 = arith.constant 0 : index
    %c0_1 = arith.constant 0 : index
    %3 = vector.load %arg2[%c0, %c0_1] : memref<8x32xf32, #tpu.memory_space<vmem>>, vector<8x32xf32>
    %c0_2 = arith.constant 0 : index
    %c0_3 = arith.constant 0 : index
    %4 = vector.load %arg3[%c0_2, %c0_3] : memref<32x128xf32, #tpu.memory_space<vmem>>, vector<32x128xf32>
    %cst = arith.constant dense<0.000000e+00> : vector<8x128xf32>
    %5 = tpu.matmul %3, %4, %cst {dimension_numbers = #tpu.dot_dimension_numbers<[1], [0], [0], [1], [0, 0, 1, 1], [], []>} : vector<8x32xf32>, vector<32x128xf32>, vector<8x128xf32> -> vector<8x128xf32>
    %c0_4 = arith.constant 0 : index
    %c0_5 = arith.constant 0 : index
    %6 = vector.load %arg6[%c0_4, %c0_5] : memref<8x128xf32, #tpu.memory_space<vmem>>, vector<8x128xf32>
    %c0_6 = arith.constant 0 : index
    %c0_7 = arith.constant 0 : index
    %7 = vector.load %arg4[%c0_6, %c0_7] : memref<128x128xf32, #tpu.memory_space<vmem>>, vector<128x128xf32>
    %cst_8 = arith.constant dense<0.000000e+00> : vector<8x128xf32>
    %8 = tpu.matmul %5, %7, %cst_8 {dimension_numbers = #tpu.dot_dimension_numbers<[1], [0], [0], [1], [0, 0, 1, 1], [], []>} : vector<8x128xf32>, vector<128x128xf32>, vector<8x128xf32> -> vector<8x128xf32>
    %9 = arith.addf %6, %8 : vector<8x128xf32>
    %c0_9 = arith.constant 0 : index
    %c0_10 = arith.constant 0 : index
    %10 = vector.load %arg6[%c0_9, %c0_10] : memref<8x128xf32, #tpu.memory_space<vmem>>, vector<8x128xf32>
    tpu.vector_store %arg6[%c0_9, %c0_10], %9 {strides = array<i32>} : memref<8x128xf32, #tpu.memory_space<vmem>>, vector<8x128xf32>,
    %c0_i32_11 = arith.constant 0 : i32
    %11 = arith.cmpi eq, %arg1, %c0_i32_11 : i32
    %12 = arith.extui %11 : i1 to i32
    %c0_i32_12 = arith.constant 0 : i32
    %13 = arith.cmpi ne, %12, %c0_i32_12 : i32
    scf.if %13 {
      %c0_13 = arith.constant 0 : index
      %c0_14 = arith.constant 0 : index
      %14 = vector.load %arg6[%c0_13, %c0_14] : memref<8x128xf32, #tpu.memory_space<vmem>>, vector<8x128xf32>
      %c0_15 = arith.constant 0 : index
      %c0_16 = arith.constant 0 : index
      %15 = vector.load %arg5[%c0_15, %c0_16] : memref<8x128xf32, #tpu.memory_space<vmem>>, vector<8x128xf32>
      tpu.vector_store %arg5[%c0_15, %c0_16], %14 {strides = array<i32>} : memref<8x128xf32, #tpu.memory_space<vmem>>, vector<8x128xf32>,
    } else {
    }
    return
  }
  func.func @transform_0(%arg0: i32, %arg1: i32) -> (i32, i32) {
    %c0_i32 = arith.constant 0 : i32
    %c0_i32_0 = arith.constant 0 : i32
    %c0_i32_1 = arith.constant 0 : i32
    return %c0_i32, %c0_i32_0 : i32, i32
  }
  func.func @transform_1(%arg0: i32, %arg1: i32) -> (i32, i32) {
    %c0_i32 = arith.constant 0 : i32
    %c0_i32_0 = arith.constant 0 : i32
    return %c0_i32, %arg1 : i32, i32
  }
  func.func @transform_2(%arg0: i32, %arg1: i32) -> (i32, i32) {
    %c0_i32 = arith.constant 0 : i32
    return %arg1, %arg0 : i32, i32
  }
  func.func @transform_3(%arg0: i32, %arg1: i32) -> (i32, i32) {
    %c0_i32 = arith.constant 0 : i32
    %c0_i32_0 = arith.constant 0 : i32
    return %c0_i32, %arg0 : i32, i32
  }
}

module attributes {stable_mosaic.version = 11 : i64} {
  func.func @amm_kernel(%arg0: i32, %arg1: i32, %arg2: memref<8x32xf32, #tpu.memory_space<vmem>>, %arg3: memref<32x128xf32, #tpu.memory_space<vmem>>, %arg4: memref<128x128xf32, #tpu.memory_space<vmem>>, %arg5: memref<8x128xf32, #tpu.memory_space<vmem>>, %arg6: memref<8x128xf32, #tpu.memory_space<vmem>>) attributes {dimension_semantics = [#tpu.dimension_semantics<parallel>, #tpu.dimension_semantics<arbitrary>], iteration_bounds = array<i64: 1, 1>, scalar_prefetch = 0 : i64, scratch_operands = 1 : i64, tpu.core_type = #tpu.core_type<tc>, window_params = [{pipeline_mode = #tpu.pipeline_mode<synchronous>, transform_indices = @transform_0, window_bounds = array<i64: 8, 32>}, {transform_indices = @transform_1, window_bounds = array<i64: 32, 128>}, {transform_indices = @transform_2, window_bounds = array<i64: 128, 128>}, {transform_indices = @transform_3, window_bounds = array<i64: 8, 128>}]} {
    %c0_i32 = arith.constant 0 : i32
    %0 = arith.cmpi eq, %arg1, %c0_i32 : i32
    %1 = arith.extui %0 : i1 to i32
    %c0_i32_0 = arith.constant 0 : i32
    %2 = arith.cmpi ne, %1, %c0_i32_0 : i32
    scf.if %2 {
      %cst_13 = arith.constant 0.000000e+00 : f32
      %14 = vector.broadcast %cst_13 : f32 to vector<8x128xf32>
      %c0_14 = arith.constant 0 : index
      %c0_15 = arith.constant 0 : index
      %15 = vector.load %arg6[%c0_14, %c0_15] : memref<8x128xf32, #tpu.memory_space<vmem>>, vector<8x128xf32>
      tpu.vector_store %arg6[%c0_14, %c0_15], %14 {strides = array<i32>} : memref<8x128xf32, #tpu.memory_space<vmem>>, vector<8x128xf32>,
    } else {
    }
    %c0 = arith.constant 0 : index
    %c0_1 = arith.constant 0 : index
    %3 = vector.load %arg2[%c0, %c0_1] : memref<8x32xf32, #tpu.memory_space<vmem>>, vector<8x32xf32>
    %c0_2 = arith.constant 0 : index
    %c0_3 = arith.constant 0 : index
    %4 = vector.load %arg3[%c0_2, %c0_3] : memref<32x128xf32, #tpu.memory_space<vmem>>, vector<32x128xf32>
    %cst = arith.constant dense<0.000000e+00> : vector<8x128xf32>
    %5 = tpu.matmul %3, %4, %cst {dimension_numbers = #tpu.dot_dimension_numbers<[1], [0], [0], [1], [0, 0, 1, 1], [], []>} : vector<8x32xf32>, vector<32x128xf32>, vector<8x128xf32> -> vector<8x128xf32>
    %c0_4 = arith.constant 0 : index
    %c0_5 = arith.constant 0 : index
    %6 = vector.load %arg6[%c0_4, %c0_5] : memref<8x128xf32, #tpu.memory_space<vmem>>, vector<8x128xf32>
    %c0_6 = arith.constant 0 : index
    %c0_7 = arith.constant 0 : index
    %7 = vector.load %arg4[%c0_6, %c0_7] : memref<128x128xf32, #tpu.memory_space<vmem>>, vector<128x128xf32>
    %cst_8 = arith.constant dense<0.000000e+00> : vector<8x128xf32>
    %8 = tpu.matmul %5, %7, %cst_8 {dimension_numbers = #tpu.dot_dimension_numbers<[1], [0], [0], [1], [0, 0, 1, 1], [], []>} : vector<8x128xf32>, vector<128x128xf32>, vector<8x128xf32> -> vector<8x128xf32>
    %9 = arith.addf %6, %8 : vector<8x128xf32>
    %c0_9 = arith.constant 0 : index
    %c0_10 = arith.constant 0 : index
    %10 = vector.load %arg6[%c0_9, %c0_10] : memref<8x128xf32, #tpu.memory_space<vmem>>, vector<8x128xf32>
    tpu.vector_store %arg6[%c0_9, %c0_10], %9 {strides = array<i32>} : memref<8x128xf32, #tpu.memory_space<vmem>>, vector<8x128xf32>,
    %c0_i32_11 = arith.constant 0 : i32
    %11 = arith.cmpi eq, %arg1, %c0_i32_11 : i32
    %12 = arith.extui %11 : i1 to i32
    %c0_i32_12 = arith.constant 0 : i32
    %13 = arith.cmpi ne, %12, %c0_i32_12 : i32
    scf.if %13 {
      %c0_13 = arith.constant 0 : index
      %c0_14 = arith.constant 0 : index
      %14 = vector.load %arg6[%c0_13, %c0_14] : memref<8x128xf32, #tpu.memory_space<vmem>>, vector<8x128xf32>
      %c0_15 = arith.constant 0 : index
      %c0_16 = arith.constant 0 : index
      %15 = vector.load %arg5[%c0_15, %c0_16] : memref<8x128xf32, #tpu.memory_space<vmem>>, vector<8x128xf32>
      tpu.vector_store %arg5[%c0_15, %c0_16], %14 {strides = array<i32>} : memref<8x128xf32, #tpu.memory_space<vmem>>, vector<8x128xf32>,
    } else {
    }
    return
  }
  func.func @transform_0(%arg0: i32, %arg1: i32) -> (i32, i32) {
    %c0_i32 = arith.constant 0 : i32
    %c0_i32_0 = arith.constant 0 : i32
    %c0_i32_1 = arith.constant 0 : i32
    return %c0_i32, %c0_i32_0 : i32, i32
  }
  func.func @transform_1(%arg0: i32, %arg1: i32) -> (i32, i32) {
    %c0_i32 = arith.constant 0 : i32
    %c0_i32_0 = arith.constant 0 : i32
    return %c0_i32, %arg1 : i32, i32
  }
  func.func @transform_2(%arg0: i32, %arg1: i32) -> (i32, i32) {
    %c0_i32 = arith.constant 0 : i32
    return %arg1, %arg0 : i32, i32
  }
  func.func @transform_3(%arg0: i32, %arg1: i32) -> (i32, i32) {
    %c0_i32 = arith.constant 0 : i32
    %c0_i32_0 = arith.constant 0 : i32
    return %c0_i32, %arg0 : i32, i32
  }
}

</mosaic_0001>

<llo_original>
// kernel: tpu_custom_call.1
$region0: #{tpu_custom_call.1}
  #allocation0 [shape = 'u32[]', space=smem, size = 0x4, offset = 0x4, fixed_abs, tag = 'smem constant byte address 0x4 - core index']
  #allocation1 [shape = 'u32[72,128]{1,0:T(1,128)}', space=vmem, size = 0x9000, scoped, tag = 'internal scratch']
  #allocation2 [shape = 'f32[8,128]{1,0:T(8,128)}', space=vmem, size = 0x1000, scoped, tag = 'scratch operand']
  %s0 = inlined_call_operand.hbm [shape: f32[8,32], index: 0, kind: input, shape index: {}]
  %s1 = inlined_call_operand.hbm [shape: f32[32,128], index: 1, kind: input, shape index: {}]
  %s2 = inlined_call_operand.hbm [shape: f32[128,128], index: 2, kind: input, shape index: {}]
  %s3 = inlined_call_operand.hbm [shape: f32[8,128], index: 3, kind: output, shape index: {}]
  %s4 = sld [smem:[#allocation0]]
  $region42: #{tpu_custom_call.1} parent=0
    _
  %s6 = ssub.s32 1, %s4
  %s7 = scalar_select 0, %s6, %s4
  $region1: #{tpu_custom_call.1} parent=0
    #allocation3 [shape = 'u8[4096]{0}', space=vmem, size = 0x1000, scoped, tag = 'input window, operand 0, single buffered']
    #allocation4 [shape = 's32[1]{0}', space=sflag, size = 0x4, scoped, tag = 'scoped memory for tpu_custom_call.1']
    #allocation5 [shape = 's32[1]{0}', space=sflag, size = 0x4, scoped, tag = 'scoped memory for tpu_custom_call.1']
    #allocation6 [shape = 'u8[16384]{0}', space=vmem, size = 0x4000, scoped, tag = 'input window, operand 1, single buffered']
    #allocation7 [shape = 's32[1]{0}', space=sflag, size = 0x4, scoped, tag = 'scoped memory for tpu_custom_call.1']
    #allocation8 [shape = 'u8[65536]{0}', space=vmem, size = 0x10000, scoped, tag = 'input window, operand 2, single buffered']
    #allocation9 [shape = 'u8[4096]{0}', space=vmem, size = 0x1000, scoped, tag = 'output window, operand 0, single buffered']
    %8 = vsyncpa [#allocation4], 0
    %9 = vsyncpa [#allocation7], 0
    %10 = vsyncpa [#allocation5], 0
    // Predicated region
    $region2: #{tpu_custom_call.1} parent=1 // pred_check
      _
    $region3: #{tpu_custom_call.1} parent=1 // pred_check_branch
      %12 = sbr.rel (0) target = $region5
    $region4: #{tpu_custom_call.1} parent=1 // pred_region
      %14 = vsyncadd [#allocation4], 0
      %s16 = sshll.u32 %s0, 4
      %s17 = int_to_ptr.hbm [resolvable:$true] %s16
      %s18 = sshll.u32 [#allocation3], 4
      %s19 = int_to_ptr.vmem [resolvable:$true] %s18
      %21 = dma.hbm_to_vmem [thread:$0]  %s17, 128, %s19, [#allocation4]
    $region5: #{tpu_custom_call.1} parent=1 // pred_fallthru
      _
    // Predicated region
    $region6: #{tpu_custom_call.1} parent=1 // pred_check
      _
    $region7: #{tpu_custom_call.1} parent=1 // pred_check_branch
      %23 = sbr.rel (0) target = $region9
    $region8: #{tpu_custom_call.1} parent=1 // pred_region
      %25 = vsyncadd [#allocation7], 0
      %s26 = sshll.u32 %s1, 4
      %s27 = int_to_ptr.hbm [resolvable:$true] %s26
      %s28 = sshll.u32 [#allocation6], 4
      %s29 = int_to_ptr.vmem [resolvable:$true] %s28
      %34 = dma.hbm_to_vmem [thread:$0]  %s27, 512, %s29, [#allocation7], 128, 128, 8
    $region9: #{tpu_custom_call.1} parent=1 // pred_fallthru
      _
    // Predicated region
    $region10: #{tpu_custom_call.1} parent=1 // pred_check
      _
    $region11: #{tpu_custom_call.1} parent=1 // pred_check_branch
      %36 = sbr.rel (0) target = $region13
    $region12: #{tpu_custom_call.1} parent=1 // pred_region
      %38 = vsyncadd [#allocation7], 0
      %s39 = sshll.u32 %s2, 4
      %s40 = int_to_ptr.hbm [resolvable:$true] %s39
      %s41 = sshll.u32 [#allocation8], 4
      %s42 = int_to_ptr.vmem [resolvable:$true] %s41
      %47 = dma.hbm_to_vmem [thread:$0]  %s40, 2048, %s42, [#allocation7], 128, 128, 8
    $region13: #{tpu_custom_call.1} parent=1 // pred_fallthru
      _
    // Predicated region
    $region14: #{tpu_custom_call.1} parent=1 // pred_check
      _
    $region15: #{tpu_custom_call.1} parent=1 // pred_check_branch
      %49 = sbr.rel (0) target = $region17
    $region16: #{tpu_custom_call.1} parent=1 // pred_region
      %51 = dma.done [#allocation4], 128
    $region17: #{tpu_custom_call.1} parent=1 // pred_fallthru
      _
    // Predicated region
    $region18: #{tpu_custom_call.1} parent=1 // pred_check
      _
    $region19: #{tpu_custom_call.1} parent=1 // pred_check_branch
      %53 = sbr.rel (0) target = $region21
    $region20: #{tpu_custom_call.1} parent=1 // pred_region
      %55 = dma.done [#allocation7], 512
    $region21: #{tpu_custom_call.1} parent=1 // pred_fallthru
      _
    // Predicated region
    $region22: #{tpu_custom_call.1} parent=1 // pred_check
      _
    $region23: #{tpu_custom_call.1} parent=1 // pred_check_branch
      %57 = sbr.rel (0) target = $region25
    $region24: #{tpu_custom_call.1} parent=1 // pred_region
      %59 = dma.done [#allocation7], 2048
    $region25: #{tpu_custom_call.1} parent=1 // pred_fallthru
      _
    %p60 = scmp.eq.s32.totalorder 0, 0
    // Predicated region
    $region26: #{tpu_custom_call.1} parent=1 // pred_check
      %p61 = pneg %p60
    $region27: #{tpu_custom_call.1} parent=1 // pred_check_branch
      %63 = sbr.rel (%p61) target = $region29
    $region28: #{tpu_custom_call.1} parent=1 // pred_region
      %64 = vst [vmem:[#allocation2] sm:$0xff] 0.0
    $region29: #{tpu_custom_call.1} parent=1 // pred_fallthru
      _
    %v65 = vld [vmem:[#allocation3] sm:$0xff]
    %v66 = vld [vmem:[#allocation6] sm:$0xff]
    %v67 = vld [vmem:[#allocation6 + $0x8] sm:$0xff]
    %v68 = vld [vmem:[#allocation6 + $0x10] sm:$0xff]
    %v69 = vld [vmem:[#allocation6 + $0x18] sm:$0xff]
    %vm70 = vcmask 261120
    %v72 = vsel %vm70, %v65, 0
    %74 = vmatpush.msra.mxu0 0.0
    %75 = vmatpush.msra.mxu0 0.0
    %76 = vmatpush.msra.mxu0 0.0
    %77 = vmatpush.msra.mxu0 0.0
    %78 = vmatpush.msra.mxu0 0.0
    %79 = vmatpush.msra.mxu0 0.0
    %80 = vmatpush.msra.mxu0 0.0
    %81 = vmatpush.msra.mxu0 0.0
    %82 = vmatpush.msra.mxu0 0.0
    %83 = vmatpush.msra.mxu0 0.0
    %84 = vmatpush.msra.mxu0 0.0
    %85 = vmatpush.msra.mxu0 0.0
    %86 = vmatpush.msra.mxu0 %v69
    %87 = vmatpush.msra.mxu0 %v68
    %88 = vmatpush.msra.mxu0 %v67
    %89 = vmatpush.msra.mxu0 %v66
    %90 = vmatmul.f32.gmra.mxu0 %v72
    %v91 = vpop.f32.mrf.mxu0
    %v92 = vadd.f32 0.0, %v91
    %93 = vdwg.mxu0
    %v94 = vld [vmem:[#allocation2] sm:$0xff]
    %v95 = vld [vmem:[#allocation8] sm:$0xff]
    %v96 = vld [vmem:[#allocation8 + $0x8] sm:$0xff]
    %v97 = vld [vmem:[#allocation8 + $0x10] sm:$0xff]
    %v98 = vld [vmem:[#allocation8 + $0x18] sm:$0xff]
    %v99 = vld [vmem:[#allocation8 + $0x20] sm:$0xff]
    %v100 = vld [vmem:[#allocation8 + $0x28] sm:$0xff]
    %v101 = vld [vmem:[#allocation8 + $0x30] sm:$0xff]
    %v102 = vld [vmem:[#allocation8 + $0x38] sm:$0xff]
    %v103 = vld [vmem:[#allocation8 + $0x40] sm:$0xff]
    %v104 = vld [vmem:[#allocation8 + $0x48] sm:$0xff]
    %v105 = vld [vmem:[#allocation8 + $0x50] sm:$0xff]
    %v106 = vld [vmem:[#allocation8 + $0x58] sm:$0xff]
    %v107 = vld [vmem:[#allocation8 + $0x60] sm:$0xff]
    %v108 = vld [vmem:[#allocation8 + $0x68] sm:$0xff]
    %v109 = vld [vmem:[#allocation8 + $0x70] sm:$0xff]
    %v110 = vld [vmem:[#allocation8 + $0x78] sm:$0xff]
    %111 = vmatpush.msra.mxu0 %v110
    %112 = vmatpush.msra.mxu0 %v109
    %113 = vmatpush.msra.mxu0 %v108
    %114 = vmatpush.msra.mxu0 %v107
    %115 = vmatpush.msra.mxu0 %v106
    %116 = vmatpush.msra.mxu0 %v105
    %117 = vmatpush.msra.mxu0 %v104
    %118 = vmatpush.msra.mxu0 %v103
    %119 = vmatpush.msra.mxu0 %v102
    %120 = vmatpush.msra.mxu0 %v101
    %121 = vmatpush.msra.mxu0 %v100
    %122 = vmatpush.msra.mxu0 %v99
    %123 = vmatpush.msra.mxu0 %v98
    %124 = vmatpush.msra.mxu0 %v97
    %125 = vmatpush.msra.mxu0 %v96
    %126 = vmatpush.msra.mxu0 %v95
    %127 = vmatmul.f32.gmra.mxu0 %v92
    %v128 = vpop.f32.mrf.mxu0
    %v129 = vadd.f32 0.0, %v128
    %130 = vdwg.mxu0
    %v131 = vadd.f32 %v94, %v129
    %132 = vst [vmem:[#allocation2] sm:$0xff] %v131
    // Predicated region
    $region30: #{tpu_custom_call.1} parent=1 // pred_check
      %p133 = pneg %p60
    $region31: #{tpu_custom_call.1} parent=1 // pred_check_branch
      %135 = sbr.rel (%p133) target = $region33
    $region32: #{tpu_custom_call.1} parent=1 // pred_region
      %v136 = vld [vmem:[#allocation2] sm:$0xff]
      %137 = vst [vmem:[#allocation9] sm:$0xff] %v136
    $region33: #{tpu_custom_call.1} parent=1 // pred_fallthru
      _
    // Predicated region
    $region34: #{tpu_custom_call.1} parent=1 // pred_check
      _
    $region35: #{tpu_custom_call.1} parent=1 // pred_check_branch
      %139 = sbr.rel (0) target = $region37
    $region36: #{tpu_custom_call.1} parent=1 // pred_region
      %141 = vsyncadd [#allocation5], 0
      %s143 = sshll.u32 [#allocation9], 4
      %s144 = int_to_ptr.vmem [resolvable:$true] %s143
      %s145 = sshll.u32 %s3, 4
      %s146 = int_to_ptr.hbm [resolvable:$true] %s145
      %148 = dma.vmem_to_hbm [thread:$0]  %s144, 128, %s146, [#allocation5]
    $region37: #{tpu_custom_call.1} parent=1 // pred_fallthru
      _
    // Predicated region
    $region38: #{tpu_custom_call.1} parent=1 // pred_check
      _
    $region39: #{tpu_custom_call.1} parent=1 // pred_check_branch
      %150 = sbr.rel (0) target = $region41
    $region40: #{tpu_custom_call.1} parent=1 // pred_region
      %152 = dma.done [#allocation5], 128
    $region41: #{tpu_custom_call.1} parent=1 // pred_fallthru
      _
    %153 = vsyncpa [#allocation4], 1
    %154 = vsyncpa [#allocation7], 1
    %155 = vsyncpa [#allocation5], 1

// kernel: tpu_custom_call.1
$region0: #{tpu_custom_call.1}
  #allocation0 [shape = 'u32[]', space=smem, size = 0x4, offset = 0x4, fixed_abs, tag = 'smem constant byte address 0x4 - core index']
  #allocation1 [shape = 'u32[72,128]{1,0:T(1,128)}', space=vmem, size = 0x9000, scoped, tag = 'internal scratch']
  #allocation2 [shape = 'f32[8,128]{1,0:T(8,128)}', space=vmem, size = 0x1000, scoped, tag = 'scratch operand']
  %s0 = inlined_call_operand.hbm [shape: f32[8,32], index: 0, kind: input, shape index: {}]
  %s1 = inlined_call_operand.hbm [shape: f32[32,128], index: 1, kind: input, shape index: {}]
  %s2 = inlined_call_operand.hbm [shape: f32[128,128], index: 2, kind: input, shape index: {}]
  %s3 = inlined_call_operand.hbm [shape: f32[8,128], index: 3, kind: output, shape index: {}]
  %s4 = sld [smem:[#allocation0]]
  $region42: #{tpu_custom_call.1} parent=0
    _
  %s6 = ssub.s32 1, %s4
  %s7 = scalar_select 0, %s6, %s4
  $region1: #{tpu_custom_call.1} parent=0
    #allocation3 [shape = 'u8[4096]{0}', space=vmem, size = 0x1000, scoped, tag = 'input window, operand 0, single buffered']
    #allocation4 [shape = 's32[1]{0}', space=sflag, size = 0x4, scoped, tag = 'scoped memory for tpu_custom_call.1']
    #allocation5 [shape = 's32[1]{0}', space=sflag, size = 0x4, scoped, tag = 'scoped memory for tpu_custom_call.1']
    #allocation6 [shape = 'u8[16384]{0}', space=vmem, size = 0x4000, scoped, tag = 'input window, operand 1, single buffered']
    #allocation7 [shape = 's32[1]{0}', space=sflag, size = 0x4, scoped, tag = 'scoped memory for tpu_custom_call.1']
    #allocation8 [shape = 'u8[65536]{0}', space=vmem, size = 0x10000, scoped, tag = 'input window, operand 2, single buffered']
    #allocation9 [shape = 'u8[4096]{0}', space=vmem, size = 0x1000, scoped, tag = 'output window, operand 0, single buffered']
    %8 = vsyncpa [#allocation4], 0
    %9 = vsyncpa [#allocation7], 0
    %10 = vsyncpa [#allocation5], 0
    // Predicated region
    $region2: #{tpu_custom_call.1} parent=1 // pred_check
      _
    $region3: #{tpu_custom_call.1} parent=1 // pred_check_branch
      %12 = sbr.rel (0) target = $region5
    $region4: #{tpu_custom_call.1} parent=1 // pred_region
      %14 = vsyncadd [#allocation4], 0
      %s16 = sshll.u32 %s0, 4
      %s17 = int_to_ptr.hbm [resolvable:$true] %s16
      %s18 = sshll.u32 [#allocation3], 4
      %s19 = int_to_ptr.vmem [resolvable:$true] %s18
      %21 = dma.hbm_to_vmem [thread:$0]  %s17, 128, %s19, [#allocation4]
    $region5: #{tpu_custom_call.1} parent=1 // pred_fallthru
      _
    // Predicated region
    $region6: #{tpu_custom_call.1} parent=1 // pred_check
      _
    $region7: #{tpu_custom_call.1} parent=1 // pred_check_branch
      %23 = sbr.rel (0) target = $region9
    $region8: #{tpu_custom_call.1} parent=1 // pred_region
      %25 = vsyncadd [#allocation7], 0
      %s26 = sshll.u32 %s1, 4
      %s27 = int_to_ptr.hbm [resolvable:$true] %s26
      %s28 = sshll.u32 [#allocation6], 4
      %s29 = int_to_ptr.vmem [resolvable:$true] %s28
      %34 = dma.hbm_to_vmem [thread:$0]  %s27, 512, %s29, [#allocation7], 128, 128, 8
    $region9: #{tpu_custom_call.1} parent=1 // pred_fallthru
      _
    // Predicated region
    $region10: #{tpu_custom_call.1} parent=1 // pred_check
      _
    $region11: #{tpu_custom_call.1} parent=1 // pred_check_branch
      %36 = sbr.rel (0) target = $region13
    $region12: #{tpu_custom_call.1} parent=1 // pred_region
      %38 = vsyncadd [#allocation7], 0
      %s39 = sshll.u32 %s2, 4
      %s40 = int_to_ptr.hbm [resolvable:$true] %s39
      %s41 = sshll.u32 [#allocation8], 4
      %s42 = int_to_ptr.vmem [resolvable:$true] %s41
      %47 = dma.hbm_to_vmem [thread:$0]  %s40, 2048, %s42, [#allocation7], 128, 128, 8
    $region13: #{tpu_custom_call.1} parent=1 // pred_fallthru
      _
    // Predicated region
    $region14: #{tpu_custom_call.1} parent=1 // pred_check
      _
    $region15: #{tpu_custom_call.1} parent=1 // pred_check_branch
      %49 = sbr.rel (0) target = $region17
    $region16: #{tpu_custom_call.1} parent=1 // pred_region
      %51 = dma.done [#allocation4], 128
    $region17: #{tpu_custom_call.1} parent=1 // pred_fallthru
      _
    // Predicated region
    $region18: #{tpu_custom_call.1} parent=1 // pred_check
      _
    $region19: #{tpu_custom_call.1} parent=1 // pred_check_branch
      %53 = sbr.rel (0) target = $region21
    $region20: #{tpu_custom_call.1} parent=1 // pred_region
      %55 = dma.done [#allocation7], 512
    $region21: #{tpu_custom_call.1} parent=1 // pred_fallthru
      _
    // Predicated region
    $region22: #{tpu_custom_call.1} parent=1 // pred_check
      _
    $region23: #{tpu_custom_call.1} parent=1 // pred_check_branch
      %57 = sbr.rel (0) target = $region25
    $region24: #{tpu_custom_call.1} parent=1 // pred_region
      %59 = dma.done [#allocation7], 2048
    $region25: #{tpu_custom_call.1} parent=1 // pred_fallthru
      _
    %p60 = scmp.eq.s32.totalorder 0, 0
    // Predicated region
    $region26: #{tpu_custom_call.1} parent=1 // pred_check
      %p61 = pneg %p60
    $region27: #{tpu_custom_call.1} parent=1 // pred_check_branch
      %63 = sbr.rel (%p61) target = $region29
    $region28: #{tpu_custom_call.1} parent=1 // pred_region
      %64 = vst [vmem:[#allocation2] sm:$0xff] 0.0
    $region29: #{tpu_custom_call.1} parent=1 // pred_fallthru
      _
    %v65 = vld [vmem:[#allocation3] sm:$0xff]
    %v66 = vld [vmem:[#allocation6] sm:$0xff]
    %v67 = vld [vmem:[#allocation6 + $0x8] sm:$0xff]
    %v68 = vld [vmem:[#allocation6 + $0x10] sm:$0xff]
    %v69 = vld [vmem:[#allocation6 + $0x18] sm:$0xff]
    %vm70 = vcmask 261120
    %v72 = vsel %vm70, %v65, 0
    %74 = vmatpush.msra.mxu0 0.0
    %75 = vmatpush.msra.mxu0 0.0
    %76 = vmatpush.msra.mxu0 0.0
    %77 = vmatpush.msra.mxu0 0.0
    %78 = vmatpush.msra.mxu0 0.0
    %79 = vmatpush.msra.mxu0 0.0
    %80 = vmatpush.msra.mxu0 0.0
    %81 = vmatpush.msra.mxu0 0.0
    %82 = vmatpush.msra.mxu0 0.0
    %83 = vmatpush.msra.mxu0 0.0
    %84 = vmatpush.msra.mxu0 0.0
    %85 = vmatpush.msra.mxu0 0.0
    %86 = vmatpush.msra.mxu0 %v69
    %87 = vmatpush.msra.mxu0 %v68
    %88 = vmatpush.msra.mxu0 %v67
    %89 = vmatpush.msra.mxu0 %v66
    %90 = vmatmul.f32.gmra.mxu0 %v72
    %v91 = vpop.f32.mrf.mxu0
    %v92 = vadd.f32 0.0, %v91
    %93 = vdwg.mxu0
    %v94 = vld [vmem:[#allocation2] sm:$0xff]
    %v95 = vld [vmem:[#allocation8] sm:$0xff]
    %v96 = vld [vmem:[#allocation8 + $0x8] sm:$0xff]
    %v97 = vld [vmem:[#allocation8 + $0x10] sm:$0xff]
    %v98 = vld [vmem:[#allocation8 + $0x18] sm:$0xff]
    %v99 = vld [vmem:[#allocation8 + $0x20] sm:$0xff]
    %v100 = vld [vmem:[#allocation8 + $0x28] sm:$0xff]
    %v101 = vld [vmem:[#allocation8 + $0x30] sm:$0xff]
    %v102 = vld [vmem:[#allocation8 + $0x38] sm:$0xff]
    %v103 = vld [vmem:[#allocation8 + $0x40] sm:$0xff]
    %v104 = vld [vmem:[#allocation8 + $0x48] sm:$0xff]
    %v105 = vld [vmem:[#allocation8 + $0x50] sm:$0xff]
    %v106 = vld [vmem:[#allocation8 + $0x58] sm:$0xff]
    %v107 = vld [vmem:[#allocation8 + $0x60] sm:$0xff]
    %v108 = vld [vmem:[#allocation8 + $0x68] sm:$0xff]
    %v109 = vld [vmem:[#allocation8 + $0x70] sm:$0xff]
    %v110 = vld [vmem:[#allocation8 + $0x78] sm:$0xff]
    %111 = vmatpush.msra.mxu0 %v110
    %112 = vmatpush.msra.mxu0 %v109
    %113 = vmatpush.msra.mxu0 %v108
    %114 = vmatpush.msra.mxu0 %v107
    %115 = vmatpush.msra.mxu0 %v106
    %116 = vmatpush.msra.mxu0 %v105
    %117 = vmatpush.msra.mxu0 %v104
    %118 = vmatpush.msra.mxu0 %v103
    %119 = vmatpush.msra.mxu0 %v102
    %120 = vmatpush.msra.mxu0 %v101
    %121 = vmatpush.msra.mxu0 %v100
    %122 = vmatpush.msra.mxu0 %v99
    %123 = vmatpush.msra.mxu0 %v98
    %124 = vmatpush.msra.mxu0 %v97
    %125 = vmatpush.msra.mxu0 %v96
    %126 = vmatpush.msra.mxu0 %v95
    %127 = vmatmul.f32.gmra.mxu0 %v92
    %v128 = vpop.f32.mrf.mxu0
    %v129 = vadd.f32 0.0, %v128
    %130 = vdwg.mxu0
    %v131 = vadd.f32 %v94, %v129
    %132 = vst [vmem:[#allocation2] sm:$0xff] %v131
    // Predicated region
    $region30: #{tpu_custom_call.1} parent=1 // pred_check
      %p133 = pneg %p60
    $region31: #{tpu_custom_call.1} parent=1 // pred_check_branch
      %135 = sbr.rel (%p133) target = $region33
    $region32: #{tpu_custom_call.1} parent=1 // pred_region
      %v136 = vld [vmem:[#allocation2] sm:$0xff]
      %137 = vst [vmem:[#allocation9] sm:$0xff] %v136
    $region33: #{tpu_custom_call.1} parent=1 // pred_fallthru
      _
    // Predicated region
    $region34: #{tpu_custom_call.1} parent=1 // pred_check
      _
    $region35: #{tpu_custom_call.1} parent=1 // pred_check_branch
      %139 = sbr.rel (0) target = $region37
    $region36: #{tpu_custom_call.1} parent=1 // pred_region
      %141 = vsyncadd [#allocation5], 0
      %s143 = sshll.u32 [#allocation9], 4
      %s144 = int_to_ptr.vmem [resolvable:$true] %s143
      %s145 = sshll.u32 %s3, 4
      %s146 = int_to_ptr.hbm [resolvable:$true] %s145
      %148 = dma.vmem_to_hbm [thread:$0]  %s144, 128, %s146, [#allocation5]
    $region37: #{tpu_custom_call.1} parent=1 // pred_fallthru
      _
    // Predicated region
    $region38: #{tpu_custom_call.1} parent=1 // pred_check
      _
    $region39: #{tpu_custom_call.1} parent=1 // pred_check_branch
      %150 = sbr.rel (0) target = $region41
    $region40: #{tpu_custom_call.1} parent=1 // pred_region
      %152 = dma.done [#allocation5], 128
    $region41: #{tpu_custom_call.1} parent=1 // pred_fallthru
      _
    %153 = vsyncpa [#allocation4], 1
    %154 = vsyncpa [#allocation7], 1
    %155 = vsyncpa [#allocation5], 1

</llo_original>
